<compile_context>
chip_gen: v5e
topology: v5e:2x2
jax: 0.10.0
libtpu: 0.0.40
codegen_flags: <defaults>
</compile_context>

<pallas_src>
import functools
import jax
import jax.numpy as jnp
from jax import lax
from jax.experimental import pallas as pl
from jax.experimental.pallas import tpu as pltpu

POSITIVE_EMOTIONS = [11, 16, 6, 8, 3, 1, 28, 13, 31, 17, 24, 0, 27]
NEGATIVE_EMOTIONS = [9, 4, 2, 14, 30, 29, 25, 15, 10, 23, 19, 18, 21, 7, 20, 5,
                     26, 12, 22]


def _round_up(x, m):
    return (x + m - 1) // m * m


def _vae_sampling_kernel(
    # inputs
    slab_ref,                      # (bb, slab_w) bf16: [q_h | eps_p | eps_n | w_mimic | 0pad]
    wh_ref, bh_ref,                # h_prior
    wheads_ref, bheads_ref,        # fused mu/logvar heads
    wdense_ref, bdense_ref,        # block-diag Dense_z_prior_{pos,neg}
    embbd_ref,                     # block-diag emotion embedding (2*NE, 2*E)
    # output
    out_ref,                       # (bb, out_w) f32: [heads(4D) | mimic(E) | nonmimic(E) | 0pad]
    *, h, d, n_pos, n_emo,
):
    f32 = jnp.float32
    bf16 = jnp.bfloat16

    slab = slab_ref[...]                               # bf16, one lane-dense load
    x = slab[:, :h]                                    # (bb, H) bf16
    eps = slab[:, h:h + 2 * d].astype(f32)             # (bb, 2D) [eps_p | eps_n]
    w_mimic = slab[:, h + 2 * d:h + 2 * d + n_emo].astype(f32)   # (bb, NE) 0/1

    # prior(): h1 = relu(h_prior(x))   (bf16 x bf16 -> f32 MXU)
    h1 = jnp.dot(x, wh_ref[...], preferred_element_type=f32) + bh_ref[...].astype(f32)
    h1 = jnp.maximum(h1, 0.0)

    # Fused heads: one lane-dense N=4*D matmul -> [mu_p | mu_n | lv_p | lv_n]
    heads = (jnp.dot(h1.astype(bf16), wheads_ref[...], preferred_element_type=f32)
             + bheads_ref[...].astype(f32))            # (bb, 4D) f32

    mu = heads[:, :2 * d]                              # [mu_p | mu_n]
    lv = heads[:, 2 * d:]                              # [lv_p | lv_n]

    # reparameterize (dropout is identity in eval mode)
    z = mu + eps * jnp.exp(0.5 * lv)                   # (bb, 2D) f32

    # Both Dense_z logits via one block-diagonal matmul: [pos(13) | neg(19)]
    logits = (jnp.dot(z.astype(bf16), wdense_ref[...], preferred_element_type=f32)
              + bdense_ref[...].astype(f32))           # (bb, NE)

    # Segmented softmax over the two emotion groups on the full NE-lane vreg.
    lane = lax.broadcasted_iota(jnp.int32, logits.shape, 1)
    is_pos_lane = lane < n_pos
    neg_inf = jnp.float32(-1e30)
    m_pos = jnp.max(jnp.where(is_pos_lane, logits, neg_inf), axis=-1, keepdims=True)
    m_neg = jnp.max(jnp.where(is_pos_lane, neg_inf, logits), axis=-1, keepdims=True)
    m = jnp.where(is_pos_lane, m_pos, m_neg)
    p = jnp.exp(logits - m)
    s_pos = jnp.sum(jnp.where(is_pos_lane, p, 0.0), axis=-1, keepdims=True)
    s_tot = jnp.sum(p, axis=-1, keepdims=True)
    s_neg = s_tot - s_pos                              # one fewer masked reduction
    inv_pos = pl.reciprocal(s_pos, approx=True)        # EUP, (bb,1)
    inv_neg = pl.reciprocal(s_neg, approx=True)
    prob = p * jnp.where(is_pos_lane, inv_pos, inv_neg)  # (bb, NE)

    # Fold the per-example is_pos(e[i]) select into the emb matmul:
    #   mimic    = [ w*prob ] @ emb_all ,  nonmimic = [ (1-w)*prob ] @ emb_all
    # done as ONE (bb, 2*NE) @ blockdiag(emb_all, emb_all) -> (bb, 2E) slab.
    weighted = jnp.concatenate([prob * w_mimic, prob * (1.0 - w_mimic)], axis=-1)
    emo = jnp.dot(weighted.astype(bf16), embbd_ref[...],
                  preferred_element_type=f32)          # (bb, 2E) f32

    # Single lane-dense fused store: [heads | mimic | nonmimic | zero-pad]
    bb = heads.shape[0]
    pad_w = out_ref.shape[-1] - heads.shape[-1] - emo.shape[-1]
    parts = [heads, emo]
    if pad_w > 0:
        parts.append(jnp.zeros((bb, pad_w), f32))
    out_ref[...] = jnp.concatenate(parts, axis=-1)


def init_params(key, hidden_dim, out_dim, emb_dim, n_emotions=32):
    """Deterministic synthetic parameters (PyTorch-Linear shapes, stored (in,out))."""
    ks = jax.random.split(key, 16)
    s = 0.1

    def lin(k, din, dout):
        kw, kb = jax.random.split(k)
        w = jax.random.normal(kw, (din, dout), jnp.float32) * s
        b = jax.random.normal(kb, (1, dout), jnp.float32) * s
        return w, b

    params = {}
    params["h_prior"] = lin(ks[0], hidden_dim, hidden_dim)
    params["mu_prior_positive"] = lin(ks[1], hidden_dim, out_dim)
    params["logvar_prior_positive"] = lin(ks[2], hidden_dim, out_dim)
    params["mu_prior_negative"] = lin(ks[3], hidden_dim, out_dim)
    params["logvar_prior_negative"] = lin(ks[4], hidden_dim, out_dim)
    params["Dense_z_prior_positive"] = lin(ks[5], out_dim, len(POSITIVE_EMOTIONS))
    params["Dense_z_prior_negative"] = lin(ks[6], out_dim, len(NEGATIVE_EMOTIONS))
    params["emb_table"] = jax.random.normal(ks[7], (n_emotions, emb_dim),
                                            jnp.float32) * s
    return params


@jax.jit
def vae_sampling_forward(q_h, e, params, eps_p, eps_n):
    """Evaluation forward pass of VAESampling.

    q_h:  (B, hidden_dim) float32
    e:    (B,) int32 emotion ids
    returns (emotions_mimic, emotions_non_mimic, mu_p, logvar_p, mu_n, logvar_n)
    """
    f32, bf16 = jnp.float32, jnp.bfloat16
    B, H = q_h.shape
    D = params["mu_prior_positive"][0].shape[1]
    E = params["emb_table"].shape[1]
    n_pos = len(POSITIVE_EMOTIONS)
    n_neg = len(NEGATIVE_EMOTIONS)
    NE = n_pos + n_neg                                   # 32 emotion lanes

    pos_ids = jnp.asarray(POSITIVE_EMOTIONS, jnp.int32)
    neg_ids = jnp.asarray(NEGATIVE_EMOTIONS, jnp.int32)

    # --- glue: is_pos(e[i]) -> per-lane mimic weights, emb row gather --------
    pos_mask = jnp.any(e[:, None] == pos_ids[None, :], axis=-1)        # (B,)
    lane_is_pos = jnp.arange(NE) < n_pos                               # (NE,)
    w_mimic = jnp.where(lane_is_pos[None, :], pos_mask[:, None],
                        ~pos_mask[:, None]).astype(bf16)               # (B, NE) 0/1
    emb_pos = params["emb_table"][pos_ids]                             # (13, E)
    emb_neg = params["emb_table"][neg_ids]                             # (19, E)

    wh, bh = params["h_prior"]
    wmp, bmp = params["mu_prior_positive"]
    wlp, blp = params["logvar_prior_positive"]
    wmn, bmn = params["mu_prior_negative"]
    wln, bln = params["logvar_prior_negative"]
    wdp, bdp = params["Dense_z_prior_positive"]
    wdn, bdn = params["Dense_z_prior_negative"]

    # --- trace-time weight packing (bf16 for HBM-byte reduction) -------------
    w_heads = jnp.concatenate([wmp, wmn, wlp, wln], axis=1).astype(bf16)   # (H, 4D)
    b_heads = jnp.concatenate([bmp, bmn, blp, bln], axis=1).astype(bf16)   # (1, 4D)
    w_dense = jnp.zeros((2 * D, NE), f32)
    w_dense = w_dense.at[:D, :n_pos].set(wdp).at[D:, n_pos:].set(wdn)
    w_dense = w_dense.astype(bf16)                                         # (2D, NE)
    b_dense = jnp.concatenate([bdp, bdn], axis=1).astype(bf16)             # (1, NE)
    emb_all = jnp.concatenate([emb_pos, emb_neg], axis=0)                  # (NE, E)
    emb_bd = jnp.zeros((2 * NE, 2 * E), f32)
    emb_bd = emb_bd.at[:NE, :E].set(emb_all).at[NE:, E:].set(emb_all)
    emb_bd = emb_bd.astype(bf16)                                           # (2NE, 2E)
    wh_b, bh_b = wh.astype(bf16), bh.astype(bf16)

    # --- batch block / grid shaping ------------------------------------------
    # Target ~2048 rows/block; for B > 1024 guarantee >= 2 grid steps so the
    # v7x megacore gets both TensorCores busy. Per-step VMEM footprint at
    # block_b=2048: slab 2*1 MiB + out 2*4 MiB + weights << 32 MiB scoped
    # default on every generation, so no vmem_limit_bytes override is needed.
    if B <= 1024:
        block_b = _round_up(B, 8)
    else:
        target = 2048
        n_steps = max(2, -(-B // target))
        block_b = _round_up(-(-B // n_steps), 8)
    B_pad = _round_up(B, block_b)
    grid = (B_pad // block_b,)

    # --- lane-dense packed input slab: [q_h | eps_p | eps_n | w_mimic | pad] --
    slab_core = jnp.concatenate(
        [q_h.astype(bf16), eps_p.astype(bf16), eps_n.astype(bf16), w_mimic],
        axis=-1)                                                           # (B, H+2D+NE)
    slab_w = _round_up(slab_core.shape[1], 128)
    slab = jnp.pad(slab_core,
                   ((0, B_pad - B), (0, slab_w - slab_core.shape[1])))     # (B_pad, slab_w)

    out_w = _round_up(4 * D + 2 * E, 128)

    def row_spec(w):
        return pl.BlockSpec((block_b, w), lambda i: (i, 0))

    def full_spec(shape):
        return pl.BlockSpec(shape, lambda i: (0, 0))

    in_specs = [
        row_spec(slab_w),                   # packed input slab
        full_spec((H, H)),                  # wh
        full_spec((1, H)),                  # bh
        full_spec((H, 4 * D)),              # w_heads
        full_spec((1, 4 * D)),              # b_heads
        full_spec((2 * D, NE)),             # w_dense
        full_spec((1, NE)),                 # b_dense
        full_spec((2 * NE, 2 * E)),         # emb_bd
    ]
    out_specs = row_spec(out_w)
    out_shape = jax.ShapeDtypeStruct((B_pad, out_w), f32)

    kernel = functools.partial(_vae_sampling_kernel, h=H, d=D,
                               n_pos=n_pos, n_emo=NE)

    out = pl.pallas_call(
        kernel,
        out_shape=out_shape,
        grid=grid,
        in_specs=in_specs,
        out_specs=out_specs,
        compiler_params=pltpu.CompilerParams(
            dimension_semantics=("parallel",)),
    )(slab, wh_b, bh_b, w_heads, b_heads, w_dense, b_dense, emb_bd)

    mu_p = out[:B, :D]
    mu_n = out[:B, D:2 * D]
    lv_p = out[:B, 2 * D:3 * D]
    lv_n = out[:B, 3 * D:4 * D]
    mimic = out[:B, 4 * D:4 * D + E]
    nonmimic = out[:B, 4 * D + E:4 * D + 2 * E]
    return mimic, nonmimic, mu_p, lv_p, mu_n, lv_n


def _reference_forward(q_h, e, params, eps_p, eps_n):
    """Pure-JAX reference mirroring the PyTorch eval forward (with the same
    bf16 casts on matmul operands that the kernel performs)."""
    f32, bf16 = jnp.float32, jnp.bfloat16

    def b(v):
        return v.astype(bf16)

    def dotf(a, w):
        return jnp.dot(b(a), b(w), preferred_element_type=f32)

    def head(name, x):
        w, bia = params[name]
        return dotf(x, w) + b(bia).astype(f32)

    pos_ids = jnp.asarray(POSITIVE_EMOTIONS, jnp.int32)
    neg_ids = jnp.asarray(NEGATIVE_EMOTIONS, jnp.int32)
    wh, bh = params["h_prior"]
    h1 = jax.nn.relu(dotf(q_h, wh) + b(bh).astype(f32))

    mu_p = head("mu_prior_positive", h1)
    lv_p = head("logvar_prior_positive", h1)
    mu_n = head("mu_prior_negative", h1)
    lv_n = head("logvar_prior_negative", h1)
    z_p = mu_p + b(eps_p).astype(f32) * jnp.exp(0.5 * lv_p)
    z_n = mu_n + b(eps_n).astype(f32) * jnp.exp(0.5 * lv_n)
    prob_p = jax.nn.softmax(head("Dense_z_prior_positive", z_p), axis=-1)
    prob_n = jax.nn.softmax(head("Dense_z_prior_negative", z_n), axis=-1)
    em_p = dotf(prob_p, params["emb_table"][pos_ids])
    em_n = dotf(prob_n, params["emb_table"][neg_ids])
    mask = jnp.any(e[:, None] == pos_ids[None, :], axis=-1)[:, None]
    mimic = jnp.where(mask, em_p, em_n)
    nonmimic = jnp.where(mask, em_n, em_p)
    return mimic, nonmimic, mu_p, lv_p, mu_n, lv_n


if __name__ == "__main__":
    HIDDEN = 32      # hidden_dim
    OUT = 32         # out_dim (latent)
    EMB = 32         # emotion embedding dim
    key = jax.random.PRNGKey(0)
    k_param, k_data = jax.random.split(key)
    params = init_params(k_param, HIDDEN, OUT, EMB)

    # B=8 (aligned) and B=37 (exercises the pad-to-block path).
    for B in (8, 37):
        kx, ke, kp, kn = jax.random.split(jax.random.fold_in(k_data, B), 4)
        q_h = jax.random.normal(kx, (B, HIDDEN), jnp.float32)
        e = jax.random.randint(ke, (B,), 0, 32, jnp.int32)
        eps_p = jax.random.normal(kp, (B, OUT), jnp.float32)
        eps_n = jax.random.normal(kn, (B, OUT), jnp.float32)

        outs = jax.block_until_ready(
            vae_sampling_forward(q_h, e, params, eps_p, eps_n))
        refs = _reference_forward(q_h, e, params, eps_p, eps_n)

        # mimic / nonmimic use pl.reciprocal(approx=True) -> slightly looser tol.
        tols = [(2e-3, 2e-3), (2e-3, 2e-3),
                (1e-4, 1e-4), (1e-4, 1e-4), (1e-4, 1e-4), (1e-4, 1e-4)]
        for o, r, (atol, rtol) in zip(outs, refs, tols):
            assert o.shape == r.shape, (o.shape, r.shape)
            assert jnp.allclose(o, r, atol=atol, rtol=rtol), float(
                jnp.max(jnp.abs(o - r)))

    # TODO(synk): training path (posterior/forward_train) and in-kernel RNG
    # (torch.randn_like) are out of scope; Gaussian eps is supplied as input.
    print("KERNEL_OK")
</pallas_src>

<mosaic_0001>
module attributes {stable_mosaic.version = 11 : i64} {
  func.func @_vae_sampling_kernel(%arg0: i32, %arg1: memref<8x128xbf16, #tpu.memory_space<vmem>>, %arg2: memref<32x32xbf16, #tpu.memory_space<vmem>>, %arg3: memref<1x32xbf16, #tpu.memory_space<vmem>>, %arg4: memref<32x128xbf16, #tpu.memory_space<vmem>>, %arg5: memref<1x128xbf16, #tpu.memory_space<vmem>>, %arg6: memref<64x32xbf16, #tpu.memory_space<vmem>>, %arg7: memref<1x32xbf16, #tpu.memory_space<vmem>>, %arg8: memref<64x64xbf16, #tpu.memory_space<vmem>>, %arg9: memref<8x256xf32, #tpu.memory_space<vmem>>) attributes {dimension_semantics = [#tpu.dimension_semantics<parallel>], iteration_bounds = array<i64: 1>, scalar_prefetch = 0 : i64, scratch_operands = 0 : i64, tpu.core_type = #tpu.core_type<tc>, window_params = [{transform_indices = @transform_0, window_bounds = array<i64: 8, 128>}, {pipeline_mode = #tpu.pipeline_mode<synchronous>, transform_indices = @transform_1, window_bounds = array<i64: 32, 32>}, {pipeline_mode = #tpu.pipeline_mode<synchronous>, transform_indices = @transform_2, window_bounds = array<i64: 1, 32>}, {pipeline_mode = #tpu.pipeline_mode<synchronous>, transform_indices = @transform_3, window_bounds = array<i64: 32, 128>}, {pipeline_mode = #tpu.pipeline_mode<synchronous>, transform_indices = @transform_4, window_bounds = array<i64: 1, 128>}, {pipeline_mode = #tpu.pipeline_mode<synchronous>, transform_indices = @transform_5, window_bounds = array<i64: 64, 32>}, {pipeline_mode = #tpu.pipeline_mode<synchronous>, transform_indices = @transform_6, window_bounds = array<i64: 1, 32>}, {pipeline_mode = #tpu.pipeline_mode<synchronous>, transform_indices = @transform_7, window_bounds = array<i64: 64, 64>}, {transform_indices = @transform_8, window_bounds = array<i64: 8, 256>}]} {
    %c0 = arith.constant 0 : index
    %c0_0 = arith.constant 0 : index
    %0 = vector.load %arg1[%c0, %c0_0] : memref<8x128xbf16, #tpu.memory_space<vmem>>, vector<8x128xbf16>
    %1 = vector.extract_strided_slice %0 {offsets = [0, 0], sizes = [8, 32], strides = [1, 1]} : vector<8x128xbf16> to vector<8x32xbf16>
    %2 = vector.extract_strided_slice %0 {offsets = [0, 32], sizes = [8, 64], strides = [1, 1]} : vector<8x128xbf16> to vector<8x64xbf16>
    %3 = arith.extf %2 : vector<8x64xbf16> to vector<8x64xf32>
    %4 = vector.extract_strided_slice %0 {offsets = [0, 96], sizes = [8, 32], strides = [1, 1]} : vector<8x128xbf16> to vector<8x32xbf16>
    %5 = arith.extf %4 : vector<8x32xbf16> to vector<8x32xf32>
    %c0_1 = arith.constant 0 : index
    %c0_2 = arith.constant 0 : index
    %6 = vector.load %arg2[%c0_1, %c0_2] : memref<32x32xbf16, #tpu.memory_space<vmem>>, vector<32x32xbf16>
    %cst = arith.constant dense<0.000000e+00> : vector<8x32xf32>
    %7 = tpu.matmul %1, %6, %cst {dimension_numbers = #tpu.dot_dimension_numbers<[1], [0], [0], [1], [0, 0, 1, 1], [], []>} : vector<8x32xbf16>, vector<32x32xbf16>, vector<8x32xf32> -> vector<8x32xf32>
    %c0_3 = arith.constant 0 : index
    %c0_4 = arith.constant 0 : index
    %8 = vector.load %arg3[%c0_3, %c0_4] : memref<1x32xbf16, #tpu.memory_space<vmem>>, vector<1x32xbf16>
    %9 = arith.extf %8 : vector<1x32xbf16> to vector<1x32xf32>
    %10 = vector.broadcast %9 : vector<1x32xf32> to vector<8x32xf32>
    %11 = arith.addf %7, %10 : vector<8x32xf32>
    %cst_5 = arith.constant 0.000000e+00 : f32
    %12 = vector.broadcast %cst_5 : f32 to vector<8x32xf32>
    %13 = arith.maximumf %11, %12 : vector<8x32xf32>
    %14 = arith.truncf %13 : vector<8x32xf32> to vector<8x32xbf16>
    %c0_6 = arith.constant 0 : index
    %c0_7 = arith.constant 0 : index
    %15 = vector.load %arg4[%c0_6, %c0_7] : memref<32x128xbf16, #tpu.memory_space<vmem>>, vector<32x128xbf16>
    %cst_8 = arith.constant dense<0.000000e+00> : vector<8x128xf32>
    %16 = tpu.matmul %14, %15, %cst_8 {dimension_numbers = #tpu.dot_dimension_numbers<[1], [0], [0], [1], [0, 0, 1, 1], [], []>} : vector<8x32xbf16>, vector<32x128xbf16>, vector<8x128xf32> -> vector<8x128xf32>
    %c0_9 = arith.constant 0 : index
    %c0_10 = arith.constant 0 : index
    %17 = vector.load %arg5[%c0_9, %c0_10] : memref<1x128xbf16, #tpu.memory_space<vmem>>, vector<1x128xbf16>
    %18 = arith.extf %17 : vector<1x128xbf16> to vector<1x128xf32>
    %19 = vector.broadcast %18 : vector<1x128xf32> to vector<8x128xf32>
    %20 = arith.addf %16, %19 : vector<8x128xf32>
    %21 = vector.extract_strided_slice %20 {offsets = [0, 0], sizes = [8, 64], strides = [1, 1]} : vector<8x128xf32> to vector<8x64xf32>
    %22 = vector.extract_strided_slice %20 {offsets = [0, 64], sizes = [8, 64], strides = [1, 1]} : vector<8x128xf32> to vector<8x64xf32>
    %cst_11 = arith.constant 5.000000e-01 : f32
    %23 = vector.broadcast %cst_11 : f32 to vector<8x64xf32>
    %24 = arith.mulf %23, %22 : vector<8x64xf32>
    %25 = math.exp %24 : vector<8x64xf32>
    %26 = arith.mulf %3, %25 : vector<8x64xf32>
    %27 = arith.addf %21, %26 : vector<8x64xf32>
    %28 = arith.truncf %27 : vector<8x64xf32> to vector<8x64xbf16>
    %c0_12 = arith.constant 0 : index
    %c0_13 = arith.constant 0 : index
    %29 = vector.load %arg6[%c0_12, %c0_13] : memref<64x32xbf16, #tpu.memory_space<vmem>>, vector<64x32xbf16>
    %cst_14 = arith.constant dense<0.000000e+00> : vector<8x32xf32>
    %30 = tpu.matmul %28, %29, %cst_14 {dimension_numbers = #tpu.dot_dimension_numbers<[1], [0], [0], [1], [0, 0, 1, 1], [], []>} : vector<8x64xbf16>, vector<64x32xbf16>, vector<8x32xf32> -> vector<8x32xf32>
    %c0_15 = arith.constant 0 : index
    %c0_16 = arith.constant 0 : index
    %31 = vector.load %arg7[%c0_15, %c0_16] : memref<1x32xbf16, #tpu.memory_space<vmem>>, vector<1x32xbf16>
    %32 = arith.extf %31 : vector<1x32xbf16> to vector<1x32xf32>
    %33 = vector.broadcast %32 : vector<1x32xf32> to vector<8x32xf32>
    %34 = arith.addf %30, %33 : vector<8x32xf32>
    %35 = tpu.iota {dimensions = array<i32: 1>} : vector<8x32xi32>
    %c13_i32 = arith.constant 13 : i32
    %36 = vector.broadcast %c13_i32 : i32 to vector<8x32xi32>
    %37 = arith.cmpi slt, %35, %36 : vector<8x32xi32>
    %cst_17 = arith.constant -1.000000e+30 : f32
    %38 = vector.broadcast %cst_17 : f32 to vector<8x32xf32>
    %39 = arith.select %37, %34, %38 : vector<8x32xi1>, vector<8x32xf32>
    %cst_18 = arith.constant dense<0xFF800000> : vector<8xf32>
    %40 = vector.multi_reduction <maximumf>, %39, %cst_18 [1] : vector<8x32xf32> to vector<8xf32>
    %41 = vector.shape_cast %40 : vector<8xf32> to vector<8x1xf32>
    %cst_19 = arith.constant -1.000000e+30 : f32
    %42 = vector.broadcast %cst_19 : f32 to vector<8x32xf32>
    %43 = arith.select %37, %42, %34 : vector<8x32xi1>, vector<8x32xf32>
    %cst_20 = arith.constant dense<0xFF800000> : vector<8xf32>
    %44 = vector.multi_reduction <maximumf>, %43, %cst_20 [1] : vector<8x32xf32> to vector<8xf32>
    %45 = vector.shape_cast %44 : vector<8xf32> to vector<8x1xf32>
    %46 = vector.shape_cast %41 : vector<8x1xf32> to vector<8x1xf32>
    %47 = vector.broadcast %46 : vector<8x1xf32> to vector<8x32xf32>
    %48 = vector.shape_cast %45 : vector<8x1xf32> to vector<8x1xf32>
    %49 = vector.broadcast %48 : vector<8x1xf32> to vector<8x32xf32>
    %50 = arith.select %37, %47, %49 : vector<8x32xi1>, vector<8x32xf32>
    %51 = arith.subf %34, %50 : vector<8x32xf32>
    %52 = math.exp %51 : vector<8x32xf32>
    %cst_21 = arith.constant 0.000000e+00 : f32
    %53 = vector.broadcast %cst_21 : f32 to vector<8x32xf32>
    %54 = arith.select %37, %52, %53 : vector<8x32xi1>, vector<8x32xf32>
    %cst_22 = arith.constant dense<0.000000e+00> : vector<8xf32>
    %55 = vector.multi_reduction <add>, %54, %cst_22 [1] : vector<8x32xf32> to vector<8xf32>
    %56 = vector.shape_cast %55 : vector<8xf32> to vector<8x1xf32>
    %cst_23 = arith.constant dense<0.000000e+00> : vector<8xf32>
    %57 = vector.multi_reduction <add>, %52, %cst_23 [1] : vector<8x32xf32> to vector<8xf32>
    %58 = vector.shape_cast %57 : vector<8xf32> to vector<8x1xf32>
    %59 = arith.subf %58, %56 : vector<8x1xf32>
    %60 = tpu.reciprocal %56 {approx = true} : vector<8x1xf32> -> vector<8x1xf32>
    %61 = tpu.reciprocal %59 {approx = true} : vector<8x1xf32> -> vector<8x1xf32>
    %62 = vector.shape_cast %60 : vector<8x1xf32> to vector<8x1xf32>
    %63 = vector.broadcast %62 : vector<8x1xf32> to vector<8x32xf32>
    %64 = vector.shape_cast %61 : vector<8x1xf32> to vector<8x1xf32>
    %65 = vector.broadcast %64 : vector<8x1xf32> to vector<8x32xf32>
    %66 = arith.select %37, %63, %65 : vector<8x32xi1>, vector<8x32xf32>
    %67 = arith.mulf %52, %66 : vector<8x32xf32>
    %68 = arith.mulf %67, %5 : vector<8x32xf32>
    %cst_24 = arith.constant 1.000000e+00 : f32
    %69 = vector.broadcast %cst_24 : f32 to vector<8x32xf32>
    %70 = arith.subf %69, %5 : vector<8x32xf32>
    %71 = arith.mulf %67, %70 : vector<8x32xf32>
    %72 = tpu.concatenate %68, %71 in 1 : vector<8x32xf32>, vector<8x32xf32> -> vector<8x64xf32>
    %73 = arith.truncf %72 : vector<8x64xf32> to vector<8x64xbf16>
    %c0_25 = arith.constant 0 : index
    %c0_26 = arith.constant 0 : index
    %74 = vector.load %arg8[%c0_25, %c0_26] : memref<64x64xbf16, #tpu.memory_space<vmem>>, vector<64x64xbf16>
    %cst_27 = arith.constant dense<0.000000e+00> : vector<8x64xf32>
    %75 = tpu.matmul %73, %74, %cst_27 {dimension_numbers = #tpu.dot_dimension_numbers<[1], [0], [0], [1], [0, 0, 1, 1], [], []>} : vector<8x64xbf16>, vector<64x64xbf16>, vector<8x64xf32> -> vector<8x64xf32>
    %cst_28 = arith.constant 0.000000e+00 : f32
    %76 = vector.broadcast %cst_28 : f32 to vector<8x64xf32>
    %77 = tpu.concatenate %20, %75, %76 in 1 : vector<8x128xf32>, vector<8x64xf32>, vector<8x64xf32> -> vector<8x256xf32>
    %c0_29 = arith.constant 0 : index
    %c0_30 = arith.constant 0 : index
    %78 = vector.load %arg9[%c0_29, %c0_30] : memref<8x256xf32, #tpu.memory_space<vmem>>, vector<8x256xf32>
    tpu.vector_store %arg9[%c0_29, %c0_30], %77 {strides = array<i32>} : memref<8x256xf32, #tpu.memory_space<vmem>>, vector<8x256xf32>,
    return
  }
  func.func @transform_0(%arg0: i32) -> (i32, i32) {
    %c0_i32 = arith.constant 0 : i32
    %c0_i32_0 = arith.constant 0 : i32
    return %arg0, %c0_i32 : i32, i32
  }
  func.func @transform_1(%arg0: i32) -> (i32, i32) {
    %c0_i32 = arith.constant 0 : i32
    %c0_i32_0 = arith.constant 0 : i32
    %c0_i32_1 = arith.constant 0 : i32
    return %c0_i32, %c0_i32_0 : i32, i32
  }
  func.func @transform_2(%arg0: i32) -> (i32, i32) {
    %c0_i32 = arith.constant 0 : i32
    %c0_i32_0 = arith.constant 0 : i32
    %c0_i32_1 = arith.constant 0 : i32
    return %c0_i32, %c0_i32_0 : i32, i32
  }
  func.func @transform_3(%arg0: i32) -> (i32, i32) {
    %c0_i32 = arith.constant 0 : i32
    %c0_i32_0 = arith.constant 0 : i32
    %c0_i32_1 = arith.constant 0 : i32
    return %c0_i32, %c0_i32_0 : i32, i32
  }
  func.func @transform_4(%arg0: i32) -> (i32, i32) {
    %c0_i32 = arith.constant 0 : i32
    %c0_i32_0 = arith.constant 0 : i32
    %c0_i32_1 = arith.constant 0 : i32
    return %c0_i32, %c0_i32_0 : i32, i32
  }
  func.func @transform_5(%arg0: i32) -> (i32, i32) {
    %c0_i32 = arith.constant 0 : i32
    %c0_i32_0 = arith.constant 0 : i32
    %c0_i32_1 = arith.constant 0 : i32
    return %c0_i32, %c0_i32_0 : i32, i32
  }
  func.func @transform_6(%arg0: i32) -> (i32, i32) {
    %c0_i32 = arith.constant 0 : i32
    %c0_i32_0 = arith.constant 0 : i32
    %c0_i32_1 = arith.constant 0 : i32
    return %c0_i32, %c0_i32_0 : i32, i32
  }
  func.func @transform_7(%arg0: i32) -> (i32, i32) {
    %c0_i32 = arith.constant 0 : i32
    %c0_i32_0 = arith.constant 0 : i32
    %c0_i32_1 = arith.constant 0 : i32
    return %c0_i32, %c0_i32_0 : i32, i32
  }
  func.func @transform_8(%arg0: i32) -> (i32, i32) {
    %c0_i32 = arith.constant 0 : i32
    %c0_i32_0 = arith.constant 0 : i32
    return %arg0, %c0_i32 : i32, i32
  }
}

</mosaic_0001>

<llo_original>
// kernel: vae_sampling_forward.1
$region0: #{vae_sampling_forward.1}
  #allocation0 [shape = 'u32[]', space=smem, size = 0x4, offset = 0x4, fixed_abs, tag = 'smem constant byte address 0x4 - core index']
  #allocation1 [shape = 'u32[72,128]{1,0:T(1,128)}', space=vmem, size = 0x9000, scoped, tag = 'internal scratch']
  %s0 = inlined_call_operand.vmem [shape: bf16[8,128], index: 0, kind: input, shape index: {}]
  %s1 = inlined_call_operand.vmem [shape: bf16[32,32], index: 1, kind: input, shape index: {}]
  %s2 = inlined_call_operand.vmem [shape: bf16[1,32], index: 2, kind: input, shape index: {}]
  %s3 = inlined_call_operand.vmem [shape: bf16[32,128], index: 3, kind: input, shape index: {}]
  %s4 = inlined_call_operand.vmem [shape: bf16[1,128], index: 4, kind: input, shape index: {}]
  %s5 = inlined_call_operand.vmem [shape: bf16[64,32], index: 5, kind: input, shape index: {}]
  %s6 = inlined_call_operand.vmem [shape: bf16[1,32], index: 6, kind: input, shape index: {}]
  %s7 = inlined_call_operand.vmem [shape: bf16[64,64], index: 7, kind: input, shape index: {}]
  %s8 = inlined_call_operand.vmem [shape: f32[8,256], index: 8, kind: output, shape index: {}]
  %s9 = sld [smem:[#allocation0]]
  $region42: #{vae_sampling_forward.1} parent=0
    _
  %s11 = ssub.s32 1, %s9
  %s12 = scalar_select 0, %s11, %s9
  // Predicated region
  $region2: #{vae_sampling_forward.1} parent=0 // pred_check
    _
  $region3: #{vae_sampling_forward.1} parent=0 // pred_check_branch
    %14 = sbr.rel (0) target = $region5
  $region4: #{vae_sampling_forward.1} parent=0 // pred_region
    _
  $region5: #{vae_sampling_forward.1} parent=0 // pred_fallthru
    _
  // Predicated region
  $region6: #{vae_sampling_forward.1} parent=0 // pred_check
    _
  $region7: #{vae_sampling_forward.1} parent=0 // pred_check_branch
    %16 = sbr.rel (0) target = $region9
  $region8: #{vae_sampling_forward.1} parent=0 // pred_region
    _
  $region9: #{vae_sampling_forward.1} parent=0 // pred_fallthru
    _
  // Predicated region
  $region10: #{vae_sampling_forward.1} parent=0 // pred_check
    _
  $region11: #{vae_sampling_forward.1} parent=0 // pred_check_branch
    %18 = sbr.rel (0) target = $region13
  $region12: #{vae_sampling_forward.1} parent=0 // pred_region
    _
  $region13: #{vae_sampling_forward.1} parent=0 // pred_fallthru
    _
  // Predicated region
  $region14: #{vae_sampling_forward.1} parent=0 // pred_check
    _
  $region15: #{vae_sampling_forward.1} parent=0 // pred_check_branch
    %20 = sbr.rel (0) target = $region17
  $region16: #{vae_sampling_forward.1} parent=0 // pred_region
    _
  $region17: #{vae_sampling_forward.1} parent=0 // pred_fallthru
    _
  // Predicated region
  $region18: #{vae_sampling_forward.1} parent=0 // pred_check
    _
  $region19: #{vae_sampling_forward.1} parent=0 // pred_check_branch
    %22 = sbr.rel (0) target = $region21
  $region20: #{vae_sampling_forward.1} parent=0 // pred_region
    _
  $region21: #{vae_sampling_forward.1} parent=0 // pred_fallthru
    _
  // Predicated region
  $region22: #{vae_sampling_forward.1} parent=0 // pred_check
    _
  $region23: #{vae_sampling_forward.1} parent=0 // pred_check_branch
    %24 = sbr.rel (0) target = $region25
  $region24: #{vae_sampling_forward.1} parent=0 // pred_region
    _
  $region25: #{vae_sampling_forward.1} parent=0 // pred_fallthru
    _
  // Predicated region
  $region26: #{vae_sampling_forward.1} parent=0 // pred_check
    _
  $region27: #{vae_sampling_forward.1} parent=0 // pred_check_branch
    %26 = sbr.rel (0) target = $region29
  $region28: #{vae_sampling_forward.1} parent=0 // pred_region
    _
  $region29: #{vae_sampling_forward.1} parent=0 // pred_fallthru
    _
  // Predicated region
  $region30: #{vae_sampling_forward.1} parent=0 // pred_check
    _
  $region31: #{vae_sampling_forward.1} parent=0 // pred_check_branch
    %28 = sbr.rel (0) target = $region33
  $region32: #{vae_sampling_forward.1} parent=0 // pred_region
    _
  $region33: #{vae_sampling_forward.1} parent=0 // pred_fallthru
    _
  %v30 = vld [vmem:[%s0] sm:$0xf]
  %v31 = vunpack.c.l.bf16 %v30
  %v32 = vld [vmem:[%s1] sm:$0xf]
  %v33 = vld [vmem:[%s1 + $0x4] sm:$0xf]
  %v34 = vld [vmem:[%s1 + $0x8] sm:$0xf]
  %v35 = vld [vmem:[%s1 + $0xc] sm:$0xf]
  %v36 = vld [vmem:[%s2] sm:$0x1]
  %v37 = vunpack.c.l.bf16 %v36
  %v38 = vperm.slane %v37, 0
  %v43 = vunpack.c.l.b16 %v32
  %v44 = vunpack.c.l.b16 %v33
  %v45 = vunpack.c.l.b16 %v34
  %v46 = vunpack.c.l.b16 %v35
  %v47 = vpack.c.b16 %v44, %v43
  %v48 = vpack.c.b16 %v46, %v45
  %vm51 = vcmask 261120
  %v53 = vsel %vm51, %v30, 0
  %55 = vmatpush.bf16.msra.mxu0 0
  %56 = vmatpush.bf16.msra.mxu0 0
  %57 = vmatpush.bf16.msra.mxu0 0
  %58 = vmatpush.bf16.msra.mxu0 0
  %59 = vmatpush.bf16.msra.mxu0 0
  %60 = vmatpush.bf16.msra.mxu0 0
  %61 = vmatpush.bf16.msra.mxu0 %v48
  %62 = vmatpush.bf16.msra.mxu0 %v47
  %63 = vmatmul.bf16.gmra.mxu0 %v53
  %v64 = vpop.f32.mrf.mxu0
  %v65 = vadd.f32 %v38, %v64
  %v66 = vpop.f32.mrf.mxu0
  %67 = vdwg.mxu0
  %v68 = vmax.f32 %v65, 0.0
  %v69 = vpack.c.bf16 %v68, %v68
  %v70 = vld [vmem:[%s3] sm:$0xf]
  %v71 = vld [vmem:[%s3 + $0x4] sm:$0xf]
  %v72 = vld [vmem:[%s3 + $0x8] sm:$0xf]
  %v73 = vld [vmem:[%s3 + $0xc] sm:$0xf]
  %v74 = vld [vmem:[%s4] sm:$0x1]
  %v75 = vunpack.c.l.bf16 %v74
  %v76 = vperm.slane %v75, 0
  %v81 = vunpack.c.l.b16 %v70
  %v82 = vunpack.c.l.b16 %v71
  %v83 = vunpack.c.l.b16 %v72
  %v84 = vunpack.c.l.b16 %v73
  %v85 = vpack.c.b16 %v82, %v81
  %v86 = vpack.c.b16 %v84, %v83
  %v90 = vsel %vm51, %v69, 0
  %92 = vmatpush.bf16.msra.mxu0 0
  %93 = vmatpush.bf16.msra.mxu0 0
  %94 = vmatpush.bf16.msra.mxu0 0
  %95 = vmatpush.bf16.msra.mxu0 0
  %96 = vmatpush.bf16.msra.mxu0 0
  %97 = vmatpush.bf16.msra.mxu0 0
  %98 = vmatpush.bf16.msra.mxu0 %v86
  %99 = vmatpush.bf16.msra.mxu0 %v85
  %100 = vmatmul.bf16.gmra.mxu0 %v90
  %v101 = vpop.f32.mrf.mxu0
  %v102 = vadd.f32 %v76, %v101
  %v103 = vpop.f32.mrf.mxu0
  %104 = vdwg.mxu0
  %v105 = vmul.f32 %v102, 0.5
  %v106 = vmul.f32 %v105, 1.442695
  %v107 = vpow.pop %v106
  %109 = vrot.lane.b32.xlu0 %v107, 96
  %v110 = vpop.permute.xlu0 %109
  %v112 = vmul.f32 %v31, %v110
  %114 = vrot.lane.b32.xlu0 %v112, 96
  %v115 = vpop.permute.xlu0 %114
  %v117 = vadd.f32 %v102, %v115
  %v118 = vpack.c.bf16 %v117, %v117
  %v119 = vld [vmem:[%s5] sm:$0xf]
  %v120 = vld [vmem:[%s5 + $0x4] sm:$0xf]
  %v121 = vld [vmem:[%s5 + $0x8] sm:$0xf]
  %v122 = vld [vmem:[%s5 + $0xc] sm:$0xf]
  %v123 = vld [vmem:[%s5 + $0x10] sm:$0xf]
  %v124 = vld [vmem:[%s5 + $0x14] sm:$0xf]
  %v125 = vld [vmem:[%s5 + $0x18] sm:$0xf]
  %v126 = vld [vmem:[%s5 + $0x1c] sm:$0xf]
  %v127 = vld [vmem:[%s6] sm:$0x1]
  %v128 = vunpack.c.l.bf16 %v127
  %v129 = vperm.slane %v128, 0
  %v138 = vunpack.c.l.b16 %v119
  %v139 = vunpack.c.l.b16 %v120
  %v140 = vunpack.c.l.b16 %v121
  %v141 = vunpack.c.l.b16 %v122
  %v142 = vunpack.c.l.b16 %v123
  %v143 = vunpack.c.l.b16 %v124
  %v144 = vunpack.c.l.b16 %v125
  %v145 = vunpack.c.l.b16 %v126
  %v146 = vpack.c.b16 %v139, %v138
  %v147 = vpack.c.b16 %v141, %v140
  %v148 = vpack.c.b16 %v143, %v142
  %v149 = vpack.c.b16 %v145, %v144
  %vm154 = vcmask 523264
  %v156 = vsel %vm154, %v118, 0
  %158 = vmatpush.bf16.msra.mxu0 0
  %159 = vmatpush.bf16.msra.mxu0 0
  %160 = vmatpush.bf16.msra.mxu0 0
  %161 = vmatpush.bf16.msra.mxu0 0
  %162 = vmatpush.bf16.msra.mxu0 %v149
  %163 = vmatpush.bf16.msra.mxu0 %v148
  %164 = vmatpush.bf16.msra.mxu0 %v147
  %165 = vmatpush.bf16.msra.mxu0 %v146
  %166 = vmatmul.bf16.gmra.mxu0 %v156
  %v167 = vpop.f32.mrf.mxu0
  %v168 = vadd.f32 %v129, %v167
  %v169 = vpop.f32.mrf.mxu0
  %170 = vdwg.mxu0
  %v171 = vlaneseq
  %v172 = vand.u32 %v171, 127
  %vm173 = vcmp.lt.s32.totalorder %v172, 13
  %v174 = vsel %vm173, %v168, -1e+30
  %v175 = vsel %vm51, %v174, -inf
  %176 = vmax.xlane.f32.xlu0 %v175
  %v177 = vpop.xlane.xlu0 %176
  %v178 = vsel %vm173, -1e+30, %v168
  %v179 = vsel %vm51, %v178, -inf
  %180 = vmax.xlane.f32.xlu0 %v179
  %v181 = vpop.xlane.xlu0 %180
  %v182 = vsel %vm173, %v177, %v181
  %v183 = vsub.f32 %v168, %v182
  %v184 = vmul.f32 %v183, 1.442695
  %v185 = vpow.pop %v184
  %v186 = vsel %vm173, %v185, 0.0
  %v187 = vsel %vm51, %v186, 0.0
  %188 = vadd.xlane.f32.xlu0 %v187
  %v189 = vpop.xlane.xlu0 %188
  %v190 = vsel %vm51, %v185, 0.0
  %191 = vadd.xlane.f32.xlu0 %v190
  %v192 = vpop.xlane.xlu0 %191
  %v193 = vsub.f32 %v192, %v189
  %v194 = vrcp.pop %v189
  %v195 = vrcp.pop %v193
  %v196 = vsel %vm173, %v194, %v195
  %v197 = vmul.f32 %v185, %v196
  %199 = vrot.lane.b32.xlu0 %v31, 32
  %v200 = vpop.permute.xlu0 %199
  %v202 = vmul.f32 %v197, %v200
  %v203 = vsub.f32 1.0, %v31
  %205 = vrot.lane.b32.xlu0 %v203, 32
  %v206 = vpop.permute.xlu0 %205
  %v208 = vmul.f32 %v197, %v206
  %210 = vrot.lane.b32.xlu0 %v208, 32
  %v211 = vpop.permute.xlu0 %210
  %v213 = vsel %vm51, %v202, %v211
  %v214 = vpack.c.bf16 %v213, %v213
  %v215 = vld [vmem:[%s7] sm:$0xf]
  %v216 = vld [vmem:[%s7 + $0x4] sm:$0xf]
  %v217 = vld [vmem:[%s7 + $0x8] sm:$0xf]
  %v218 = vld [vmem:[%s7 + $0xc] sm:$0xf]
  %v219 = vld [vmem:[%s7 + $0x10] sm:$0xf]
  %v220 = vld [vmem:[%s7 + $0x14] sm:$0xf]
  %v221 = vld [vmem:[%s7 + $0x18] sm:$0xf]
  %v222 = vld [vmem:[%s7 + $0x1c] sm:$0xf]
  %v231 = vunpack.c.l.b16 %v215
  %v232 = vunpack.c.l.b16 %v216
  %v233 = vunpack.c.l.b16 %v217
  %v234 = vunpack.c.l.b16 %v218
  %v235 = vunpack.c.l.b16 %v219
  %v236 = vunpack.c.l.b16 %v220
  %v237 = vunpack.c.l.b16 %v221
  %v238 = vunpack.c.l.b16 %v222
  %v239 = vpack.c.b16 %v232, %v231
  %v240 = vpack.c.b16 %v234, %v233
  %v241 = vpack.c.b16 %v236, %v235
  %v242 = vpack.c.b16 %v238, %v237
  %v248 = vsel %vm154, %v214, 0
  %250 = vmatpush.bf16.msra.mxu0 0
  %251 = vmatpush.bf16.msra.mxu0 0
  %252 = vmatpush.bf16.msra.mxu0 0
  %253 = vmatpush.bf16.msra.mxu0 0
  %254 = vmatpush.bf16.msra.mxu0 %v242
  %255 = vmatpush.bf16.msra.mxu0 %v241
  %256 = vmatpush.bf16.msra.mxu0 %v240
  %257 = vmatpush.bf16.msra.mxu0 %v239
  %258 = vmatmul.bf16.gmra.mxu0 %v248
  %v259 = vpop.f32.mrf.mxu0
  %v260 = vadd.f32 0.0, %v259
  %v261 = vpop.f32.mrf.mxu0
  %262 = vdwg.mxu0
  %v263 = vsel %vm154, %v260, 0.0
  %264 = vst [vmem:[%s8] sm:$0xff] %v102
  %265 = vst [vmem:[%s8 + $0x8] sm:$0xff] %v263
  // Predicated region
  $region34: #{vae_sampling_forward.1} parent=0 // pred_check
    _
  $region35: #{vae_sampling_forward.1} parent=0 // pred_check_branch
    %267 = sbr.rel (0) target = $region37
  $region36: #{vae_sampling_forward.1} parent=0 // pred_region
    _
  $region37: #{vae_sampling_forward.1} parent=0 // pred_fallthru
    _
  // Predicated region
  $region38: #{vae_sampling_forward.1} parent=0 // pred_check
    _
  $region39: #{vae_sampling_forward.1} parent=0 // pred_check_branch
    %269 = sbr.rel (0) target = $region41
  $region40: #{vae_sampling_forward.1} parent=0 // pred_region
    _
  $region41: #{vae_sampling_forward.1} parent=0 // pred_fallthru
    _

</llo_original>
